<compile_context>
chip_gen: v7x
topology: tpu7x:2x2x1
jax: 0.10.0
libtpu: 0.0.40
codegen_flags: <defaults>
</compile_context>

<pallas_src>
import jax
import jax.numpy as jnp
from jax.experimental import pallas as pl
from jax.experimental.pallas import tpu as pltpu


def _ceil_to(x: int, m: int) -> int:
    return -(-x // m) * m


# ---------------------------------------------------------------------------
# Stage 1: r = tanh(context @ Wq_c + decoder_state @ Wq_d) @ Wa
# One-shot kernel; all operands are tiny and fully resident in VMEM.
# ---------------------------------------------------------------------------
def _qr_kernel(ctx_ref, dec_ref, wqc_ref, wqd_ref, wa_ref, r_ref):
    q = jnp.tanh(
        jnp.dot(ctx_ref[...], wqc_ref[...], preferred_element_type=jnp.float32)
        + jnp.dot(dec_ref[...], wqd_ref[...], preferred_element_type=jnp.float32)
    )
    r_ref[...] = jnp.dot(
        q, wa_ref[...], preferred_element_type=jnp.float32
    ).astype(r_ref.dtype)


# ---------------------------------------------------------------------------
# Stage 2: energy = r @ Wo  (HBM-bound: Wo is streamed, tiled over vocab)
# ---------------------------------------------------------------------------
def _wo_kernel(r_ref, wo_ref, out_ref):
    out_ref[...] = jnp.dot(
        r_ref[...], wo_ref[...], preferred_element_type=jnp.float32
    ).astype(out_ref.dtype)


def as_readout(context, decoder_state, wq_c, wq_d, wa, wo, *,
               tv=1024, stream_dtype=jnp.bfloat16, out_dtype=jnp.float32):
    """ASReadout forward.

    context: (B, E_enc), decoder_state: (B, E_dec)
    wq_c: (E_enc, D), wq_d: (E_dec, D), wa: (D, M), wo: (M, V)
    (weights are (in_features, out_features), i.e. nn.Linear.weight transposed)
    Returns energy: (B, V) in `out_dtype`.
    """
    B, E_enc = context.shape
    _, E_dec = decoder_state.shape
    D = wq_c.shape[1]
    M = wa.shape[1]
    V = wo.shape[1]

    # --- Stage 1: q/r computed once (not per vocab tile). Output in the
    # streaming dtype so the Stage-2 matmul is a native bf16 MXU op.
    r = pl.pallas_call(
        _qr_kernel,
        out_shape=jax.ShapeDtypeStruct((B, M), stream_dtype),
    )(context, decoder_state, wq_c, wq_d, wa)

    # --- Stage 2: tile only the (large) vocab dimension.
    # Cap the tile at the (128-aligned) vocab size so tiny vocabs don't
    # over-pad; pad V up to a multiple of the tile otherwise.
    tv_eff = min(int(tv), _ceil_to(V, 128))
    v_pad = _ceil_to(V, tv_eff)

    wo_s = wo.astype(stream_dtype)
    if v_pad != V:
        wo_s = jnp.pad(wo_s, ((0, 0), (0, v_pad - V)))

    # Explicit VMEM budget (v7x has only 64 MiB physical / 32 MiB scoped):
    # double-buffered Wo tile + double-buffered output tile + resident r.
    itm_s = jnp.dtype(stream_dtype).itemsize
    itm_o = jnp.dtype(out_dtype).itemsize
    need = (2 * M * tv_eff * itm_s          # Wo tiles (double-buffered)
            + 2 * B * tv_eff * itm_o        # output tiles (double-buffered)
            + B * M * itm_s                 # resident r
            + (2 << 20))                    # headroom
    vmem_limit = int(max(need, 16 << 20))

    grid = (v_pad // tv_eff,)
    energy = pl.pallas_call(
        _wo_kernel,
        out_shape=jax.ShapeDtypeStruct((B, v_pad), out_dtype),
        grid_spec=pltpu.PrefetchScalarGridSpec(
            num_scalar_prefetch=0,
            grid=grid,
            in_specs=[
                pl.BlockSpec((B, M), lambda j: (0, 0)),       # r (tiny, resident)
                pl.BlockSpec((M, tv_eff), lambda j: (0, j)),  # Wo (bf16, streamed)
                # (If DMA is still exposed after the tv/bf16 changes, this is
                # the spec to bump with pipeline_mode=pl.Buffered(3).)
            ],
            out_specs=pl.BlockSpec((B, tv_eff), lambda j: (0, j)),
        ),
        compiler_params=pltpu.CompilerParams(
            # Keep the vocab axis "parallel": on v7x the two TensorCores split
            # the otherwise-sequential vocab grid (~2x); neutral on v5e/v6e.
            dimension_semantics=("parallel",),
            vmem_limit_bytes=vmem_limit,
        ),
    )(r, wo_s)

    if v_pad != V:
        energy = energy[:, :V]
    return energy


def _init_linear(key, in_features, out_features):
    # Deterministic synthetic init (kaiming-uniform-ish scale); stored as
    # (in_features, out_features) i.e. already transposed vs. nn.Linear.weight.
    bound = 1.0 / jnp.sqrt(jnp.float32(in_features))
    return jax.random.uniform(
        key, (in_features, out_features), jnp.float32, -bound, bound
    )


if __name__ == "__main__":
    # Small shapes consistent with the module's forward:
    #   context: (B, enc_hidden), decoder_state: (B, dec_hidden)
    B = 8
    enc_hidden = 32
    dec_hidden = 32
    embed = 32
    vocab = 2500   # deliberately NOT a multiple of 128 -> exercises padding path

    key = jax.random.PRNGKey(0)
    k_ctx, k_dec, k_wq, k_wa, k_wo = jax.random.split(key, 5)

    context = jax.random.normal(k_ctx, (B, enc_hidden), jnp.float32)
    decoder_state = jax.random.normal(k_dec, (B, dec_hidden), jnp.float32)

    # Wq: Linear(enc_hidden + dec_hidden -> dec_hidden), split into two halves.
    wq_full = _init_linear(k_wq, enc_hidden + dec_hidden, dec_hidden)
    wq_c = wq_full[:enc_hidden, :]
    wq_d = wq_full[enc_hidden:, :]
    # Wa: Linear(dec_hidden -> embed), Wo: Linear(embed -> vocab).
    wa = _init_linear(k_wa, dec_hidden, embed)
    wo = _init_linear(k_wo, embed, vocab)
    # Note: folding Wa@Wo into one (D, V) weight is only a win when D <= M;
    # in the reference module D=350 > M=300, so the two-matmul form is kept.
    # TODO(synk): weight tying (tie=True) in the original couples Wo to the
    # embedding table of a sibling module; here Wo is a free synthetic weight.

    energy = as_readout(context, decoder_state, wq_c, wq_d, wa, wo)
    energy = jax.block_until_ready(energy)

    # Pure-JAX reference with matching bf16 streaming precision (f32 accumulate).
    q_ref = jnp.tanh(jnp.concatenate([context, decoder_state], axis=1) @ wq_full)
    r_ref = (q_ref @ wa).astype(jnp.bfloat16).astype(jnp.float32)
    wo_ref = wo.astype(jnp.bfloat16).astype(jnp.float32)
    ref = r_ref @ wo_ref

    assert energy.shape == (B, vocab)
    assert energy.dtype == jnp.float32
    assert jnp.allclose(energy, ref, atol=1e-2, rtol=1e-2), "mismatch vs reference"

    print("KERNEL_OK")
</pallas_src>

<mosaic_0001>
module attributes {stable_mosaic.version = 11 : i64} {
  func.func @_qr_kernel(%arg0: memref<8x32xf32, #tpu.memory_space<vmem>>, %arg1: memref<8x32xf32, #tpu.memory_space<vmem>>, %arg2: memref<32x32xf32, #tpu.memory_space<vmem>>, %arg3: memref<32x32xf32, #tpu.memory_space<vmem>>, %arg4: memref<32x32xf32, #tpu.memory_space<vmem>>, %arg5: memref<8x32xbf16, #tpu.memory_space<vmem>>) attributes {dimension_semantics = [], scalar_prefetch = 0 : i64, scratch_operands = 0 : i64, tpu.core_type = #tpu.core_type<tc>} {
    %c0 = arith.constant 0 : index
    %c0_0 = arith.constant 0 : index
    %0 = vector.load %arg0[%c0, %c0_0] : memref<8x32xf32, #tpu.memory_space<vmem>>, vector<8x32xf32>
    %c0_1 = arith.constant 0 : index
    %c0_2 = arith.constant 0 : index
    %1 = vector.load %arg2[%c0_1, %c0_2] : memref<32x32xf32, #tpu.memory_space<vmem>>, vector<32x32xf32>
    %cst = arith.constant dense<0.000000e+00> : vector<8x32xf32>
    %2 = tpu.matmul %0, %1, %cst {dimension_numbers = #tpu.dot_dimension_numbers<[1], [0], [0], [1], [0, 0, 1, 1], [], []>} : vector<8x32xf32>, vector<32x32xf32>, vector<8x32xf32> -> vector<8x32xf32>
    %c0_3 = arith.constant 0 : index
    %c0_4 = arith.constant 0 : index
    %3 = vector.load %arg1[%c0_3, %c0_4] : memref<8x32xf32, #tpu.memory_space<vmem>>, vector<8x32xf32>
    %c0_5 = arith.constant 0 : index
    %c0_6 = arith.constant 0 : index
    %4 = vector.load %arg3[%c0_5, %c0_6] : memref<32x32xf32, #tpu.memory_space<vmem>>, vector<32x32xf32>
    %cst_7 = arith.constant dense<0.000000e+00> : vector<8x32xf32>
    %5 = tpu.matmul %3, %4, %cst_7 {dimension_numbers = #tpu.dot_dimension_numbers<[1], [0], [0], [1], [0, 0, 1, 1], [], []>} : vector<8x32xf32>, vector<32x32xf32>, vector<8x32xf32> -> vector<8x32xf32>
    %6 = arith.addf %2, %5 : vector<8x32xf32>
    %7 = math.tanh %6 : vector<8x32xf32>
    %c0_8 = arith.constant 0 : index
    %c0_9 = arith.constant 0 : index
    %8 = vector.load %arg4[%c0_8, %c0_9] : memref<32x32xf32, #tpu.memory_space<vmem>>, vector<32x32xf32>
    %cst_10 = arith.constant dense<0.000000e+00> : vector<8x32xf32>
    %9 = tpu.matmul %7, %8, %cst_10 {dimension_numbers = #tpu.dot_dimension_numbers<[1], [0], [0], [1], [0, 0, 1, 1], [], []>} : vector<8x32xf32>, vector<32x32xf32>, vector<8x32xf32> -> vector<8x32xf32>
    %10 = arith.truncf %9 : vector<8x32xf32> to vector<8x32xbf16>
    %c0_11 = arith.constant 0 : index
    %c0_12 = arith.constant 0 : index
    %11 = vector.load %arg5[%c0_11, %c0_12] : memref<8x32xbf16, #tpu.memory_space<vmem>>, vector<8x32xbf16>
    tpu.vector_store %arg5[%c0_11, %c0_12], %10 {strides = array<i32>} : memref<8x32xbf16, #tpu.memory_space<vmem>>, vector<8x32xbf16>,
    return
  }
}

</mosaic_0001>

<llo_original>
// kernel: tpu_custom_call.1
$region0: #{tpu_custom_call.1}
  #allocation0 [shape = 'u32[]', space=smem, size = 0x4, offset = 0x4, fixed_abs, tag = 'smem constant byte address 0x4 - core index']
  #allocation1 [shape = 'u32[144,128]{1,0:T(1,128)}', space=vmem, size = 0x12000, scoped, tag = 'internal scratch']
  %s0 = inlined_call_operand.hbm [shape: f32[8,32], index: 0, kind: input, shape index: {}]
  %s1 = inlined_call_operand.hbm [shape: f32[8,32], index: 1, kind: input, shape index: {}]
  %s2 = inlined_call_operand.hbm [shape: f32[32,32], index: 2, kind: input, shape index: {}]
  %s3 = inlined_call_operand.hbm [shape: f32[32,32], index: 3, kind: input, shape index: {}]
  %s4 = inlined_call_operand.hbm [shape: f32[32,32], index: 4, kind: input, shape index: {}]
  %s5 = inlined_call_operand.hbm [shape: bf16[8,32], index: 5, kind: output, shape index: {}]
  %s6 = sld [smem:[#allocation0]]
  $region50: #{tpu_custom_call.1} parent=0
    _
  %s8 = ssub.s32 1, %s6
  %s9 = scalar_select 0, %s8, %s6
  $region1: #{tpu_custom_call.1} parent=0
    #allocation2 [shape = 'u8[4096]{0}', space=vmem, size = 0x1000, scoped, tag = 'input window, operand 0, single buffered']
    #allocation3 [shape = 's32[1]{0}', space=sflag, size = 0x4, scoped, tag = 'scoped memory for tpu_custom_call.1']
    #allocation4 [shape = 's32[1]{0}', space=sflag, size = 0x4, scoped, tag = 'scoped memory for tpu_custom_call.1']
    #allocation5 [shape = 'u8[4096]{0}', space=vmem, size = 0x1000, scoped, tag = 'input window, operand 1, single buffered']
    #allocation6 [shape = 's32[1]{0}', space=sflag, size = 0x4, scoped, tag = 'scoped memory for tpu_custom_call.1']
    #allocation7 [shape = 'u8[16384]{0}', space=vmem, size = 0x4000, scoped, tag = 'input window, operand 2, single buffered']
    #allocation8 [shape = 'u8[16384]{0}', space=vmem, size = 0x4000, scoped, tag = 'input window, operand 3, single buffered']
    #allocation9 [shape = 's32[1]{0}', space=sflag, size = 0x4, scoped, tag = 'scoped memory for tpu_custom_call.1']
    #allocation10 [shape = 'u8[16384]{0}', space=vmem, size = 0x4000, scoped, tag = 'input window, operand 4, single buffered']
    #allocation11 [shape = 'u8[2048]{0}', space=vmem, size = 0x800, scoped, tag = 'output window, operand 0, single buffered']
    %10 = vsyncpa [#allocation3], 0
    %11 = vsyncpa [#allocation6], 0
    %12 = vsyncpa [#allocation9], 0
    %13 = vsyncpa [#allocation4], 0
    // Predicated region
    $region2: #{tpu_custom_call.1} parent=1 // pred_check
      _
    $region3: #{tpu_custom_call.1} parent=1 // pred_check_branch
      %15 = sbr.rel (0) target = $region5
    $region4: #{tpu_custom_call.1} parent=1 // pred_region
      %s17 = ssub.s32 128, 128
      %18 = vsyncadd [#allocation3], %s17
      %s20 = sshll.u32 [#allocation2], 4
      %s21 = int_to_ptr.vmem [resolvable:$true] %s20
      %23 = dma.hbm_to_vmem [thread:$0]  %s0, 128, %s21, [#allocation3]
    $region5: #{tpu_custom_call.1} parent=1 // pred_fallthru
      _
    // Predicated region
    $region6: #{tpu_custom_call.1} parent=1 // pred_check
      _
    $region7: #{tpu_custom_call.1} parent=1 // pred_check_branch
      %25 = sbr.rel (0) target = $region9
    $region8: #{tpu_custom_call.1} parent=1 // pred_region
      %s27 = ssub.s32 128, 128
      %28 = vsyncadd [#allocation6], %s27
      %s30 = sshll.u32 [#allocation5], 4
      %s31 = int_to_ptr.vmem [resolvable:$true] %s30
      %33 = dma.hbm_to_vmem [thread:$0]  %s1, 128, %s31, [#allocation6]
    $region9: #{tpu_custom_call.1} parent=1 // pred_fallthru
      _
    // Predicated region
    $region10: #{tpu_custom_call.1} parent=1 // pred_check
      _
    $region11: #{tpu_custom_call.1} parent=1 // pred_check_branch
      %35 = sbr.rel (0) target = $region13
    $region12: #{tpu_custom_call.1} parent=1 // pred_region
      %s37 = ssub.s32 512, 512
      %38 = vsyncadd [#allocation6], %s37
      %s39 = sshll.u32 [#allocation7], 4
      %s40 = int_to_ptr.vmem [resolvable:$true] %s39
      %45 = dma.hbm_to_vmem [thread:$0]  %s2, 512, %s40, [#allocation6], 128, 128, 8
    $region13: #{tpu_custom_call.1} parent=1 // pred_fallthru
      _
    // Predicated region
    $region14: #{tpu_custom_call.1} parent=1 // pred_check
      _
    $region15: #{tpu_custom_call.1} parent=1 // pred_check_branch
      %47 = sbr.rel (0) target = $region17
    $region16: #{tpu_custom_call.1} parent=1 // pred_region
      %s49 = ssub.s32 512, 512
      %50 = vsyncadd [#allocation9], %s49
      %s51 = sshll.u32 [#allocation8], 4
      %s52 = int_to_ptr.vmem [resolvable:$true] %s51
      %57 = dma.hbm_to_vmem [thread:$0]  %s3, 512, %s52, [#allocation9], 128, 128, 8
    $region17: #{tpu_custom_call.1} parent=1 // pred_fallthru
      _
    // Predicated region
    $region18: #{tpu_custom_call.1} parent=1 // pred_check
      _
    $region19: #{tpu_custom_call.1} parent=1 // pred_check_branch
      %59 = sbr.rel (0) target = $region21
    $region20: #{tpu_custom_call.1} parent=1 // pred_region
      %s61 = ssub.s32 512, 512
      %62 = vsyncadd [#allocation9], %s61
      %s63 = sshll.u32 [#allocation10], 4
      %s64 = int_to_ptr.vmem [resolvable:$true] %s63
      %69 = dma.hbm_to_vmem [thread:$0]  %s4, 512, %s64, [#allocation9], 128, 128, 8
    $region21: #{tpu_custom_call.1} parent=1 // pred_fallthru
      _
    // Predicated region
    $region22: #{tpu_custom_call.1} parent=1 // pred_check
      _
    $region23: #{tpu_custom_call.1} parent=1 // pred_check_branch
      %71 = sbr.rel (0) target = $region25
    $region24: #{tpu_custom_call.1} parent=1 // pred_region
      %72 = dma.done [#allocation3], 128
    $region25: #{tpu_custom_call.1} parent=1 // pred_fallthru
      _
    // Predicated region
    $region26: #{tpu_custom_call.1} parent=1 // pred_check
      _
    $region27: #{tpu_custom_call.1} parent=1 // pred_check_branch
      %74 = sbr.rel (0) target = $region29
    $region28: #{tpu_custom_call.1} parent=1 // pred_region
      %75 = dma.done [#allocation6], 128
    $region29: #{tpu_custom_call.1} parent=1 // pred_fallthru
      _
    // Predicated region
    $region30: #{tpu_custom_call.1} parent=1 // pred_check
      _
    $region31: #{tpu_custom_call.1} parent=1 // pred_check_branch
      %77 = sbr.rel (0) target = $region33
    $region32: #{tpu_custom_call.1} parent=1 // pred_region
      %78 = dma.done [#allocation6], 512
    $region33: #{tpu_custom_call.1} parent=1 // pred_fallthru
      _
    // Predicated region
    $region34: #{tpu_custom_call.1} parent=1 // pred_check
      _
    $region35: #{tpu_custom_call.1} parent=1 // pred_check_branch
      %80 = sbr.rel (0) target = $region37
    $region36: #{tpu_custom_call.1} parent=1 // pred_region
      %81 = dma.done [#allocation9], 512
    $region37: #{tpu_custom_call.1} parent=1 // pred_fallthru
      _
    // Predicated region
    $region38: #{tpu_custom_call.1} parent=1 // pred_check
      _
    $region39: #{tpu_custom_call.1} parent=1 // pred_check_branch
      %83 = sbr.rel (0) target = $region41
    $region40: #{tpu_custom_call.1} parent=1 // pred_region
      %84 = dma.done [#allocation9], 512
    $region41: #{tpu_custom_call.1} parent=1 // pred_fallthru
      _
    %v85 = vld [vmem:[#allocation2] sm:$0xff]
    %v86 = vld [vmem:[#allocation7] sm:$0xff]
    %v87 = vld [vmem:[#allocation7 + $0x8] sm:$0xff]
    %v88 = vld [vmem:[#allocation7 + $0x10] sm:$0xff]
    %v89 = vld [vmem:[#allocation7 + $0x18] sm:$0xff]
    %v90 = vld [vmem:[#allocation5] sm:$0xff]
    %v91 = vld [vmem:[#allocation8] sm:$0xff]
    %v92 = vld [vmem:[#allocation8 + $0x8] sm:$0xff]
    %v93 = vld [vmem:[#allocation8 + $0x10] sm:$0xff]
    %v94 = vld [vmem:[#allocation8 + $0x18] sm:$0xff]
    %vm95 = vcmask 261120
    %v97 = vsel %vm95, %v90, 0
    %99 = vmatprep.subr.mxu0 0.0
    %100 = vmatpush1.msra.mxu0 %v91
    %101 = vmatprep.subr.mxu0 0.0
    %102 = vmatpush1.msra.mxu0 %v92
    %103 = vmatprep.subr.mxu0 0.0
    %104 = vmatpush1.msra.mxu0 %v93
    %105 = vmatprep.subr.mxu0 0.0
    %106 = vmatpush1.msra.mxu0 %v94
    %107 = vmatprep.subr.mxu0 0.0
    %108 = vmatpush1.msra.mxu0 0.0
    %109 = vmatprep.subr.mxu0 0.0
    %110 = vmatpush1.msra.mxu0 0.0
    %111 = vmatprep.subr.mxu0 0.0
    %112 = vmatpush1.msra.mxu0 0.0
    %113 = vmatprep.subr.mxu0 0.0
    %114 = vmatpush1.msra.mxu0 0.0
    %115 = vmatprep.subr.mxu0 0.0
    %116 = vmatpush1.msra.mxu0 0.0
    %117 = vmatprep.subr.mxu0 0.0
    %118 = vmatpush1.msra.mxu0 0.0
    %119 = vmatprep.subr.mxu0 0.0
    %120 = vmatpush1.msra.mxu0 0.0
    %121 = vmatprep.subr.mxu0 0.0
    %122 = vmatpush1.msra.mxu0 0.0
    %123 = vmatprep.subr.mxu0 0.0
    %124 = vmatpush1.msra.mxu0 0.0
    %125 = vmatprep.subr.mxu0 0.0
    %126 = vmatpush1.msra.mxu0 0.0
    %127 = vmatprep.subr.mxu0 0.0
    %128 = vmatpush1.msra.mxu0 0.0
    %129 = vmatprep.subr.mxu0 0.0
    %130 = vmatpush1.msra.mxu0 0.0
    %131 = vmatprep.subr.mxu0 0.0
    %132 = vmatpush1.msra.mxu0 0.0
    %133 = vmatprep.subr.mxu0 0.0
    %134 = vmatpush1.msra.mxu0 0.0
    %135 = vmatprep.subr.mxu0 0.0
    %136 = vmatpush1.msra.mxu0 0.0
    %137 = vmatprep.subr.mxu0 0.0
    %138 = vmatpush1.msra.mxu0 0.0
    %139 = vmatprep.subr.mxu0 0.0
    %140 = vmatpush1.msra.mxu0 0.0
    %141 = vmatprep.subr.mxu0 0.0
    %142 = vmatpush1.msra.mxu0 0.0
    %143 = vmatprep.subr.mxu0 0.0
    %144 = vmatpush1.msra.mxu0 0.0
    %145 = vmatprep.subr.mxu0 0.0
    %146 = vmatpush1.msra.mxu0 0.0
    %147 = vmatprep.subr.mxu0 0.0
    %148 = vmatpush1.msra.mxu0 0.0
    %149 = vmatprep.subr.mxu0 0.0
    %150 = vmatpush1.msra.mxu0 0.0
    %151 = vmatprep.subr.mxu0 0.0
    %152 = vmatpush1.msra.mxu0 0.0
    %153 = vmatprep.subr.mxu0 0.0
    %154 = vmatpush1.msra.mxu0 0.0
    %155 = vmatprep.subr.mxu0 0.0
    %156 = vmatpush1.msra.mxu0 0.0
    %157 = vmatprep.subr.mxu0 0.0
    %158 = vmatpush1.msra.mxu0 0.0
    %159 = vmatprep.subr.mxu0 0.0
    %160 = vmatpush1.msra.mxu0 0.0
    %161 = vmatprep.subr.mxu0 0.0
    %162 = vmatpush1.msra.mxu0 0.0
    %163 = vmatprep.mubr.f32.mxu0 0.0
    %164 = vmatmul.mubr.f32.gmra.mrb[0].mxu0 %v97
    %v165 = vpop.f32.mrb[0].mxu0
    %v166 = vadd.f32 0.0, %v165
    %v167 = vpop.f32.mrb[0].mxu0
    %168 = vdwg.mxu0
    %v170 = vsel %vm95, %v85, 0
    %172 = vmatprep.subr.mxu0 0.0
    %173 = vmatpush1.msra.mxu0 %v86
    %174 = vmatprep.subr.mxu0 0.0
    %175 = vmatpush1.msra.mxu0 %v87
    %176 = vmatprep.subr.mxu0 0.0
    %177 = vmatpush1.msra.mxu0 %v88
    %178 = vmatprep.subr.mxu0 0.0
    %179 = vmatpush1.msra.mxu0 %v89
    %180 = vmatprep.subr.mxu0 0.0
    %181 = vmatpush1.msra.mxu0 0.0
    %182 = vmatprep.subr.mxu0 0.0
    %183 = vmatpush1.msra.mxu0 0.0
    %184 = vmatprep.subr.mxu0 0.0
    %185 = vmatpush1.msra.mxu0 0.0
    %186 = vmatprep.subr.mxu0 0.0
    %187 = vmatpush1.msra.mxu0 0.0
    %188 = vmatprep.subr.mxu0 0.0
    %189 = vmatpush1.msra.mxu0 0.0
    %190 = vmatprep.subr.mxu0 0.0
    %191 = vmatpush1.msra.mxu0 0.0
    %192 = vmatprep.subr.mxu0 0.0
    %193 = vmatpush1.msra.mxu0 0.0
    %194 = vmatprep.subr.mxu0 0.0
    %195 = vmatpush1.msra.mxu0 0.0
    %196 = vmatprep.subr.mxu0 0.0
    %197 = vmatpush1.msra.mxu0 0.0
    %198 = vmatprep.subr.mxu0 0.0
    %199 = vmatpush1.msra.mxu0 0.0
    %200 = vmatprep.subr.mxu0 0.0
    %201 = vmatpush1.msra.mxu0 0.0
    %202 = vmatprep.subr.mxu0 0.0
    %203 = vmatpush1.msra.mxu0 0.0
    %204 = vmatprep.subr.mxu0 0.0
    %205 = vmatpush1.msra.mxu0 0.0
    %206 = vmatprep.subr.mxu0 0.0
    %207 = vmatpush1.msra.mxu0 0.0
    %208 = vmatprep.subr.mxu0 0.0
    %209 = vmatpush1.msra.mxu0 0.0
    %210 = vmatprep.subr.mxu0 0.0
    %211 = vmatpush1.msra.mxu0 0.0
    %212 = vmatprep.subr.mxu0 0.0
    %213 = vmatpush1.msra.mxu0 0.0
    %214 = vmatprep.subr.mxu0 0.0
    %215 = vmatpush1.msra.mxu0 0.0
    %216 = vmatprep.subr.mxu0 0.0
    %217 = vmatpush1.msra.mxu0 0.0
    %218 = vmatprep.subr.mxu0 0.0
    %219 = vmatpush1.msra.mxu0 0.0
    %220 = vmatprep.subr.mxu0 0.0
    %221 = vmatpush1.msra.mxu0 0.0
    %222 = vmatprep.subr.mxu0 0.0
    %223 = vmatpush1.msra.mxu0 0.0
    %224 = vmatprep.subr.mxu0 0.0
    %225 = vmatpush1.msra.mxu0 0.0
    %226 = vmatprep.subr.mxu0 0.0
    %227 = vmatpush1.msra.mxu0 0.0
    %228 = vmatprep.subr.mxu0 0.0
    %229 = vmatpush1.msra.mxu0 0.0
    %230 = vmatprep.subr.mxu0 0.0
    %231 = vmatpush1.msra.mxu0 0.0
    %232 = vmatprep.subr.mxu0 0.0
    %233 = vmatpush1.msra.mxu0 0.0
    %234 = vmatprep.subr.mxu0 0.0
    %235 = vmatpush1.msra.mxu0 0.0
    %236 = vmatprep.mubr.f32.mxu0 0.0
    %237 = vmatmul.mubr.f32.gmra.mrb[0].mxu0 %v170
    %v238 = vpop.f32.mrb[0].mxu0
    %v239 = vadd.f32 %v166, %v238
    %v240 = vpop.f32.mrb[0].mxu0
    %241 = vdwg.mxu0
    %v242 = vtanh.pop %v239
    %v243 = vld [vmem:[#allocation10] sm:$0xff]
    %v244 = vld [vmem:[#allocation10 + $0x8] sm:$0xff]
    %v245 = vld [vmem:[#allocation10 + $0x10] sm:$0xff]
    %v246 = vld [vmem:[#allocation10 + $0x18] sm:$0xff]
    %v248 = vsel %vm95, %v242, 0
    %250 = vmatprep.subr.mxu0 0.0
    %251 = vmatpush1.msra.mxu0 %v243
    %252 = vmatprep.subr.mxu0 0.0
    %253 = vmatpush1.msra.mxu0 %v244
    %254 = vmatprep.subr.mxu0 0.0
    %255 = vmatpush1.msra.mxu0 %v245
    %256 = vmatprep.subr.mxu0 0.0
    %257 = vmatpush1.msra.mxu0 %v246
    %258 = vmatprep.subr.mxu0 0.0
    %259 = vmatpush1.msra.mxu0 0.0
    %260 = vmatprep.subr.mxu0 0.0
    %261 = vmatpush1.msra.mxu0 0.0
    %262 = vmatprep.subr.mxu0 0.0
    %263 = vmatpush1.msra.mxu0 0.0
    %264 = vmatprep.subr.mxu0 0.0
    %265 = vmatpush1.msra.mxu0 0.0
    %266 = vmatprep.subr.mxu0 0.0
    %267 = vmatpush1.msra.mxu0 0.0
    %268 = vmatprep.subr.mxu0 0.0
    %269 = vmatpush1.msra.mxu0 0.0
    %270 = vmatprep.subr.mxu0 0.0
    %271 = vmatpush1.msra.mxu0 0.0
    %272 = vmatprep.subr.mxu0 0.0
    %273 = vmatpush1.msra.mxu0 0.0
    %274 = vmatprep.subr.mxu0 0.0
    %275 = vmatpush1.msra.mxu0 0.0
    %276 = vmatprep.subr.mxu0 0.0
    %277 = vmatpush1.msra.mxu0 0.0
    %278 = vmatprep.subr.mxu0 0.0
    %279 = vmatpush1.msra.mxu0 0.0
    %280 = vmatprep.subr.mxu0 0.0
    %281 = vmatpush1.msra.mxu0 0.0
    %282 = vmatprep.subr.mxu0 0.0
    %283 = vmatpush1.msra.mxu0 0.0
    %284 = vmatprep.subr.mxu0 0.0
    %285 = vmatpush1.msra.mxu0 0.0
    %286 = vmatprep.subr.mxu0 0.0
    %287 = vmatpush1.msra.mxu0 0.0
    %288 = vmatprep.subr.mxu0 0.0
    %289 = vmatpush1.msra.mxu0 0.0
    %290 = vmatprep.subr.mxu0 0.0
    %291 = vmatpush1.msra.mxu0 0.0
    %292 = vmatprep.subr.mxu0 0.0
    %293 = vmatpush1.msra.mxu0 0.0
    %294 = vmatprep.subr.mxu0 0.0
    %295 = vmatpush1.msra.mxu0 0.0
    %296 = vmatprep.subr.mxu0 0.0
    %297 = vmatpush1.msra.mxu0 0.0
    %298 = vmatprep.subr.mxu0 0.0
    %299 = vmatpush1.msra.mxu0 0.0
    %300 = vmatprep.subr.mxu0 0.0
    %301 = vmatpush1.msra.mxu0 0.0
    %302 = vmatprep.subr.mxu0 0.0
    %303 = vmatpush1.msra.mxu0 0.0
    %304 = vmatprep.subr.mxu0 0.0
    %305 = vmatpush1.msra.mxu0 0.0
    %306 = vmatprep.subr.mxu0 0.0
    %307 = vmatpush1.msra.mxu0 0.0
    %308 = vmatprep.subr.mxu0 0.0
    %309 = vmatpush1.msra.mxu0 0.0
    %310 = vmatprep.subr.mxu0 0.0
    %311 = vmatpush1.msra.mxu0 0.0
    %312 = vmatprep.subr.mxu0 0.0
    %313 = vmatpush1.msra.mxu0 0.0
    %314 = vmatprep.mubr.f32.mxu0 0.0
    %315 = vmatmul.mubr.f32.gmra.mrb[0].mxu0 %v248
    %v316 = vpop.f32.mrb[0].mxu0
    %v317 = vadd.f32 0.0, %v316
    %v318 = vpop.f32.mrb[0].mxu0
    %319 = vdwg.mxu0
    %v320 = vpack.c.bf16 %v317, %v317
    %vm321 = vcmask 257024
    %322 = vst.msk [vmem:[#allocation11] sm:$0xf] %vm321, %v320
    // Predicated region
    $region42: #{tpu_custom_call.1} parent=1 // pred_check
      _
    $region43: #{tpu_custom_call.1} parent=1 // pred_check_branch
      %324 = sbr.rel (0) target = $region45
    $region44: #{tpu_custom_call.1} parent=1 // pred_region
      %s326 = ssub.s32 64, 64
      %327 = vsyncadd [#allocation4], %s326
      %s329 = sshll.u32 [#allocation11], 4
      %s330 = int_to_ptr.vmem [resolvable:$true] %s329
      %332 = dma.vmem_to_hbm [thread:$0]  %s330, 64, %s5, [#allocation4]
    $region45: #{tpu_custom_call.1} parent=1 // pred_fallthru
      _
    // Predicated region
    $region46: #{tpu_custom_call.1} parent=1 // pred_check
      _
    $region47: #{tpu_custom_call.1} parent=1 // pred_check_branch
      %334 = sbr.rel (0) target = $region49
    $region48: #{tpu_custom_call.1} parent=1 // pred_region
      %335 = dma.done [#allocation4], 64
    $region49: #{tpu_custom_call.1} parent=1 // pred_fallthru
      _
    %336 = vsyncpa [#allocation3], 1
    %337 = vsyncpa [#allocation6], 1
    %338 = vsyncpa [#allocation9], 1
    %339 = vsyncpa [#allocation4], 1

</llo_original>
